<compile_context>
chip_gen: v7x
topology: tpu7x:2x2x1
jax: 0.10.0
libtpu: 0.0.40
codegen_flags: <defaults>
</compile_context>

<pallas_src>
import functools

import jax
import jax.numpy as jnp
from jax.experimental import pallas as pl
from jax.experimental.pallas import tpu as pltpu


def _lstm_theta_kernel(x_ref, wih_ref, whh_ref, wroll_ref, theta_ref, b_ref,
                       out_ref):
    """Whole recurrence in one kernel invocation (tiny shapes -> full VMEM blocks).

    x_ref     : (T*B, D)  bf16   time-major, flattened
    wih_ref   : (D, 4H)   bf16   W_ih^T
    whh_ref   : (H, 4H)   bf16   W_hh^T
    wroll_ref : (H, 4H)   bf16   theta @ W_ih^T + W_hh^T (fused rollout weight)
    theta_ref : (H, D)    bf16
    b_ref     : (B, 4H)   f32    b_ih + b_hh, pre-broadcast over batch
    out_ref   : (P*B, D)  f32    prediction-step-major, flattened
    """
    TB, _ = x_ref.shape
    H = whh_ref.shape[0]
    B = b_ref.shape[0]
    T = TB // B
    P = out_ref.shape[0] // B
    H4 = 4 * H

    # ---- batched input projection: one MXU matmul instead of T tiny ones ------
    xp = jnp.dot(x_ref[...], wih_ref[...],
                 preferred_element_type=jnp.float32)            # (T*B, 4H) f32
    xp = xp.reshape(T, B, H4) + b_ref[...]                      # bias folded once

    whh = whh_ref[...]
    wroll = wroll_ref[...]
    bias = b_ref[...]

    def gate_update(gates, c):
        # One full-width sigmoid over all 4H lanes (covers i, f, o in one EUP
        # pass), one tanh on the g chunk; activations stay f32.
        sg = jax.nn.sigmoid(gates)
        i_g = sg[:, 0 * H:1 * H]
        f_g = sg[:, 1 * H:2 * H]
        o_g = sg[:, 3 * H:4 * H]
        g_g = jnp.tanh(gates[:, 2 * H:3 * H])
        c_new = f_g * c + i_g * g_g
        h_new = o_g * jnp.tanh(c_new)
        return h_new, c_new

    h = jnp.zeros((B, H), jnp.float32)
    c = jnp.zeros((B, H), jnp.float32)

    # ---- encode the observed sequence (fully unrolled; h/c live in vregs) -----
    for t in range(T):
        gates = xp[t] + jnp.dot(h.astype(jnp.bfloat16), whh,
                                preferred_element_type=jnp.float32)
        h, c = gate_update(gates, c)

    # ---- autoregressive rollout: theta fused into the weight -> 1 matmul/step -
    hs = [h]
    for _ in range(P - 1):
        gates = bias + jnp.dot(h.astype(jnp.bfloat16), wroll,
                               preferred_element_type=jnp.float32)
        h, c = gate_update(gates, c)
        hs.append(h)

    # ---- single batched theta readout for all P predictions -------------------
    h_all = jnp.concatenate(hs, axis=0).astype(jnp.bfloat16)    # (P*B, H)
    out_ref[...] = jnp.dot(h_all, theta_ref[...],
                           preferred_element_type=jnp.float32)  # (P*B, D)


@functools.partial(jax.jit, static_argnames=("num_timesteps_pred",))
def lstm_theta_forward(x, theta, w_ih, w_hh, b_ih, b_hh, *, num_timesteps_pred):
    """x: (B, T, D) f32, theta: (H, D) f32. Returns (B, P, D) f32."""
    B, T, D = x.shape
    H = w_hh.shape[1]
    P = num_timesteps_pred

    # Time-major, flattened for the batched input projection; bf16 MXU operands.
    x_flat = jnp.transpose(x, (1, 0, 2)).reshape(T * B, D).astype(jnp.bfloat16)
    wih_t = jnp.transpose(w_ih, (1, 0))                  # (D, 4H)
    whh_t = jnp.transpose(w_hh, (1, 0))                  # (H, 4H)
    # pred @ W_ih^T == h @ (theta @ W_ih^T)  ->  fuse theta into the rollout weight.
    w_roll = theta @ wih_t + whh_t                       # (H, 4H)
    bias = jnp.broadcast_to((b_ih + b_hh)[None, :].astype(jnp.float32),
                            (B, 4 * H))                  # (B, 4H)

    vmem = pl.BlockSpec(memory_space=pltpu.MemorySpace.VMEM)
    out_flat = pl.pallas_call(
        _lstm_theta_kernel,
        out_shape=jax.ShapeDtypeStruct((P * B, D), jnp.float32),
        in_specs=[vmem] * 6,
        out_specs=vmem,
    )(x_flat,
      wih_t.astype(jnp.bfloat16),
      whh_t.astype(jnp.bfloat16),
      w_roll.astype(jnp.bfloat16),
      theta.astype(jnp.bfloat16),
      bias)

    return jnp.transpose(out_flat.reshape(P, B, D), (1, 0, 2))   # (B, P, D)


def _reference_forward(x, theta, w_ih, w_hh, b_ih, b_hh, num_timesteps_pred):
    """Plain-JAX f32 re-implementation of the PyTorch forward, for verification."""
    B, T, D = x.shape
    H = w_hh.shape[1]
    h = jnp.zeros((B, H), jnp.float32)
    c = jnp.zeros((B, H), jnp.float32)

    def cell(inp, h, c):
        g = inp @ w_ih.T + b_ih + h @ w_hh.T + b_hh
        i = jax.nn.sigmoid(g[:, 0 * H:1 * H])
        f = jax.nn.sigmoid(g[:, 1 * H:2 * H])
        gg = jnp.tanh(g[:, 2 * H:3 * H])
        o = jax.nn.sigmoid(g[:, 3 * H:4 * H])
        c = f * c + i * gg
        h = o * jnp.tanh(c)
        return h, c

    for t in range(T):
        h, c = cell(x[:, t], h, c)
    pred = h @ theta
    preds = [pred]
    for _ in range(num_timesteps_pred - 1):
        h, c = cell(pred, h, c)
        pred = h @ theta
        preds.append(pred)
    return jnp.stack(preds, axis=1)


if __name__ == "__main__":
    # Small shapes consistent with the module's forward:
    #   x: (num_samples, timesteps, input_size), theta: (hidden_size, input_size)
    B, T, D, H, P = 8, 8, 16, 32, 4

    key = jax.random.PRNGKey(0)
    kx, kt, k1, k2, k3, k4 = jax.random.split(key, 6)

    x = jax.random.normal(kx, (B, T, D), jnp.float32)
    theta = jax.random.normal(kt, (H, D), jnp.float32) * 0.1

    # Deterministic LSTMCell parameters (PyTorch-style U(-1/sqrt(H), 1/sqrt(H))).
    bound = 1.0 / jnp.sqrt(jnp.float32(H))
    w_ih = jax.random.uniform(k1, (4 * H, D), jnp.float32, -bound, bound)
    w_hh = jax.random.uniform(k2, (4 * H, H), jnp.float32, -bound, bound)
    b_ih = jax.random.uniform(k3, (4 * H,), jnp.float32, -bound, bound)
    b_hh = jax.random.uniform(k4, (4 * H,), jnp.float32, -bound, bound)

    out = lstm_theta_forward(x, theta, w_ih, w_hh, b_ih, b_hh,
                             num_timesteps_pred=P)
    out = jax.block_until_ready(out)

    assert out.shape == (B, P, D), out.shape

    ref = _reference_forward(x, theta, w_ih, w_hh, b_ih, b_hh, P)
    # bf16 MXU operands + recurrence over T+P-1 steps -> loosened tolerance vs
    # the f32 reference (as anticipated in the perf review).
    assert jnp.allclose(out, ref, atol=5e-2, rtol=5e-2), float(
        jnp.max(jnp.abs(out - ref)))

    print("KERNEL_OK")
</pallas_src>

<mosaic_0001>
module attributes {stable_mosaic.version = 11 : i64} {
  func.func @_lstm_theta_kernel(%arg0: memref<64x16xbf16, #tpu.memory_space<vmem>>, %arg1: memref<16x128xbf16, #tpu.memory_space<vmem>>, %arg2: memref<32x128xbf16, #tpu.memory_space<vmem>>, %arg3: memref<32x128xbf16, #tpu.memory_space<vmem>>, %arg4: memref<32x16xbf16, #tpu.memory_space<vmem>>, %arg5: memref<8x128xf32, #tpu.memory_space<vmem>>, %arg6: memref<32x16xf32, #tpu.memory_space<vmem>>) attributes {dimension_semantics = [], scalar_prefetch = 0 : i64, scratch_operands = 0 : i64, tpu.core_type = #tpu.core_type<tc>} {
    %c0 = arith.constant 0 : index
    %c0_0 = arith.constant 0 : index
    %0 = vector.load %arg0[%c0, %c0_0] : memref<64x16xbf16, #tpu.memory_space<vmem>>, vector<64x16xbf16>
    %c0_1 = arith.constant 0 : index
    %c0_2 = arith.constant 0 : index
    %1 = vector.load %arg1[%c0_1, %c0_2] : memref<16x128xbf16, #tpu.memory_space<vmem>>, vector<16x128xbf16>
    %cst = arith.constant dense<0.000000e+00> : vector<64x128xf32>
    %2 = tpu.matmul %0, %1, %cst {dimension_numbers = #tpu.dot_dimension_numbers<[1], [0], [0], [1], [0, 0, 1, 1], [], []>} : vector<64x16xbf16>, vector<16x128xbf16>, vector<64x128xf32> -> vector<64x128xf32>
    %3 = vector.shape_cast %2 : vector<64x128xf32> to vector<8x8x128xf32>
    %c0_3 = arith.constant 0 : index
    %c0_4 = arith.constant 0 : index
    %4 = vector.load %arg5[%c0_3, %c0_4] : memref<8x128xf32, #tpu.memory_space<vmem>>, vector<8x128xf32>
    %5 = vector.shape_cast %4 : vector<8x128xf32> to vector<1x8x128xf32>
    %6 = vector.broadcast %5 : vector<1x8x128xf32> to vector<8x8x128xf32>
    %7 = arith.addf %3, %6 : vector<8x8x128xf32>
    %c0_5 = arith.constant 0 : index
    %c0_6 = arith.constant 0 : index
    %8 = vector.load %arg2[%c0_5, %c0_6] : memref<32x128xbf16, #tpu.memory_space<vmem>>, vector<32x128xbf16>
    %c0_7 = arith.constant 0 : index
    %c0_8 = arith.constant 0 : index
    %9 = vector.load %arg3[%c0_7, %c0_8] : memref<32x128xbf16, #tpu.memory_space<vmem>>, vector<32x128xbf16>
    %c0_9 = arith.constant 0 : index
    %c0_10 = arith.constant 0 : index
    %10 = vector.load %arg5[%c0_9, %c0_10] : memref<8x128xf32, #tpu.memory_space<vmem>>, vector<8x128xf32>
    %cst_11 = arith.constant 0.000000e+00 : f32
    %11 = vector.broadcast %cst_11 : f32 to vector<8x32xf32>
    %cst_12 = arith.constant 0.000000e+00 : f32
    %12 = vector.broadcast %cst_12 : f32 to vector<8x32xf32>
    %13 = vector.extract_strided_slice %7 {offsets = [0, 0, 0], sizes = [1, 8, 128], strides = [1, 1, 1]} : vector<8x8x128xf32> to vector<1x8x128xf32>
    %14 = vector.shape_cast %13 : vector<1x8x128xf32> to vector<8x128xf32>
    %15 = arith.truncf %11 : vector<8x32xf32> to vector<8x32xbf16>
    %cst_13 = arith.constant dense<0.000000e+00> : vector<8x128xf32>
    %16 = tpu.matmul %15, %8, %cst_13 {dimension_numbers = #tpu.dot_dimension_numbers<[1], [0], [0], [1], [0, 0, 1, 1], [], []>} : vector<8x32xbf16>, vector<32x128xbf16>, vector<8x128xf32> -> vector<8x128xf32>
    %17 = arith.addf %14, %16 : vector<8x128xf32>
    %18 = arith.negf %17 : vector<8x128xf32>
    %19 = math.exp %18 : vector<8x128xf32>
    %cst_14 = arith.constant 1.000000e+00 : f32
    %20 = vector.broadcast %cst_14 : f32 to vector<8x128xf32>
    %21 = arith.addf %20, %19 : vector<8x128xf32>
    %22 = arith.divf %20, %21 : vector<8x128xf32>
    %23 = vector.extract_strided_slice %22 {offsets = [0, 0], sizes = [8, 32], strides = [1, 1]} : vector<8x128xf32> to vector<8x32xf32>
    %24 = vector.extract_strided_slice %22 {offsets = [0, 32], sizes = [8, 32], strides = [1, 1]} : vector<8x128xf32> to vector<8x32xf32>
    %25 = vector.extract_strided_slice %22 {offsets = [0, 96], sizes = [8, 32], strides = [1, 1]} : vector<8x128xf32> to vector<8x32xf32>
    %26 = vector.extract_strided_slice %17 {offsets = [0, 64], sizes = [8, 32], strides = [1, 1]} : vector<8x128xf32> to vector<8x32xf32>
    %27 = math.tanh %26 : vector<8x32xf32>
    %28 = arith.mulf %24, %12 : vector<8x32xf32>
    %29 = arith.mulf %23, %27 : vector<8x32xf32>
    %30 = arith.addf %28, %29 : vector<8x32xf32>
    %31 = math.tanh %30 : vector<8x32xf32>
    %32 = arith.mulf %25, %31 : vector<8x32xf32>
    %33 = vector.extract_strided_slice %7 {offsets = [1, 0, 0], sizes = [1, 8, 128], strides = [1, 1, 1]} : vector<8x8x128xf32> to vector<1x8x128xf32>
    %34 = vector.shape_cast %33 : vector<1x8x128xf32> to vector<8x128xf32>
    %35 = arith.truncf %32 : vector<8x32xf32> to vector<8x32xbf16>
    %cst_15 = arith.constant dense<0.000000e+00> : vector<8x128xf32>
    %36 = tpu.matmul %35, %8, %cst_15 {dimension_numbers = #tpu.dot_dimension_numbers<[1], [0], [0], [1], [0, 0, 1, 1], [], []>} : vector<8x32xbf16>, vector<32x128xbf16>, vector<8x128xf32> -> vector<8x128xf32>
    %37 = arith.addf %34, %36 : vector<8x128xf32>
    %38 = arith.negf %37 : vector<8x128xf32>
    %39 = math.exp %38 : vector<8x128xf32>
    %cst_16 = arith.constant 1.000000e+00 : f32
    %40 = vector.broadcast %cst_16 : f32 to vector<8x128xf32>
    %41 = arith.addf %40, %39 : vector<8x128xf32>
    %42 = arith.divf %40, %41 : vector<8x128xf32>
    %43 = vector.extract_strided_slice %42 {offsets = [0, 0], sizes = [8, 32], strides = [1, 1]} : vector<8x128xf32> to vector<8x32xf32>
    %44 = vector.extract_strided_slice %42 {offsets = [0, 32], sizes = [8, 32], strides = [1, 1]} : vector<8x128xf32> to vector<8x32xf32>
    %45 = vector.extract_strided_slice %42 {offsets = [0, 96], sizes = [8, 32], strides = [1, 1]} : vector<8x128xf32> to vector<8x32xf32>
    %46 = vector.extract_strided_slice %37 {offsets = [0, 64], sizes = [8, 32], strides = [1, 1]} : vector<8x128xf32> to vector<8x32xf32>
    %47 = math.tanh %46 : vector<8x32xf32>
    %48 = arith.mulf %44, %30 : vector<8x32xf32>
    %49 = arith.mulf %43, %47 : vector<8x32xf32>
    %50 = arith.addf %48, %49 : vector<8x32xf32>
    %51 = math.tanh %50 : vector<8x32xf32>
    %52 = arith.mulf %45, %51 : vector<8x32xf32>
    %53 = vector.extract_strided_slice %7 {offsets = [2, 0, 0], sizes = [1, 8, 128], strides = [1, 1, 1]} : vector<8x8x128xf32> to vector<1x8x128xf32>
    %54 = vector.shape_cast %53 : vector<1x8x128xf32> to vector<8x128xf32>
    %55 = arith.truncf %52 : vector<8x32xf32> to vector<8x32xbf16>
    %cst_17 = arith.constant dense<0.000000e+00> : vector<8x128xf32>
    %56 = tpu.matmul %55, %8, %cst_17 {dimension_numbers = #tpu.dot_dimension_numbers<[1], [0], [0], [1], [0, 0, 1, 1], [], []>} : vector<8x32xbf16>, vector<32x128xbf16>, vector<8x128xf32> -> vector<8x128xf32>
    %57 = arith.addf %54, %56 : vector<8x128xf32>
    %58 = arith.negf %57 : vector<8x128xf32>
    %59 = math.exp %58 : vector<8x128xf32>
    %cst_18 = arith.constant 1.000000e+00 : f32
    %60 = vector.broadcast %cst_18 : f32 to vector<8x128xf32>
    %61 = arith.addf %60, %59 : vector<8x128xf32>
    %62 = arith.divf %60, %61 : vector<8x128xf32>
    %63 = vector.extract_strided_slice %62 {offsets = [0, 0], sizes = [8, 32], strides = [1, 1]} : vector<8x128xf32> to vector<8x32xf32>
    %64 = vector.extract_strided_slice %62 {offsets = [0, 32], sizes = [8, 32], strides = [1, 1]} : vector<8x128xf32> to vector<8x32xf32>
    %65 = vector.extract_strided_slice %62 {offsets = [0, 96], sizes = [8, 32], strides = [1, 1]} : vector<8x128xf32> to vector<8x32xf32>
    %66 = vector.extract_strided_slice %57 {offsets = [0, 64], sizes = [8, 32], strides = [1, 1]} : vector<8x128xf32> to vector<8x32xf32>
    %67 = math.tanh %66 : vector<8x32xf32>
    %68 = arith.mulf %64, %50 : vector<8x32xf32>
    %69 = arith.mulf %63, %67 : vector<8x32xf32>
    %70 = arith.addf %68, %69 : vector<8x32xf32>
    %71 = math.tanh %70 : vector<8x32xf32>
    %72 = arith.mulf %65, %71 : vector<8x32xf32>
    %73 = vector.extract_strided_slice %7 {offsets = [3, 0, 0], sizes = [1, 8, 128], strides = [1, 1, 1]} : vector<8x8x128xf32> to vector<1x8x128xf32>
    %74 = vector.shape_cast %73 : vector<1x8x128xf32> to vector<8x128xf32>
    %75 = arith.truncf %72 : vector<8x32xf32> to vector<8x32xbf16>
    %cst_19 = arith.constant dense<0.000000e+00> : vector<8x128xf32>
    %76 = tpu.matmul %75, %8, %cst_19 {dimension_numbers = #tpu.dot_dimension_numbers<[1], [0], [0], [1], [0, 0, 1, 1], [], []>} : vector<8x32xbf16>, vector<32x128xbf16>, vector<8x128xf32> -> vector<8x128xf32>
    %77 = arith.addf %74, %76 : vector<8x128xf32>
    %78 = arith.negf %77 : vector<8x128xf32>
    %79 = math.exp %78 : vector<8x128xf32>
    %cst_20 = arith.constant 1.000000e+00 : f32
    %80 = vector.broadcast %cst_20 : f32 to vector<8x128xf32>
    %81 = arith.addf %80, %79 : vector<8x128xf32>
    %82 = arith.divf %80, %81 : vector<8x128xf32>
    %83 = vector.extract_strided_slice %82 {offsets = [0, 0], sizes = [8, 32], strides = [1, 1]} : vector<8x128xf32> to vector<8x32xf32>
    %84 = vector.extract_strided_slice %82 {offsets = [0, 32], sizes = [8, 32], strides = [1, 1]} : vector<8x128xf32> to vector<8x32xf32>
    %85 = vector.extract_strided_slice %82 {offsets = [0, 96], sizes = [8, 32], strides = [1, 1]} : vector<8x128xf32> to vector<8x32xf32>
    %86 = vector.extract_strided_slice %77 {offsets = [0, 64], sizes = [8, 32], strides = [1, 1]} : vector<8x128xf32> to vector<8x32xf32>
    %87 = math.tanh %86 : vector<8x32xf32>
    %88 = arith.mulf %84, %70 : vector<8x32xf32>
    %89 = arith.mulf %83, %87 : vector<8x32xf32>
    %90 = arith.addf %88, %89 : vector<8x32xf32>
    %91 = math.tanh %90 : vector<8x32xf32>
    %92 = arith.mulf %85, %91 : vector<8x32xf32>
    %93 = vector.extract_strided_slice %7 {offsets = [4, 0, 0], sizes = [1, 8, 128], strides = [1, 1, 1]} : vector<8x8x128xf32> to vector<1x8x128xf32>
    %94 = vector.shape_cast %93 : vector<1x8x128xf32> to vector<8x128xf32>
    %95 = arith.truncf %92 : vector<8x32xf32> to vector<8x32xbf16>
    %cst_21 = arith.constant dense<0.000000e+00> : vector<8x128xf32>
    %96 = tpu.matmul %95, %8, %cst_21 {dimension_numbers = #tpu.dot_dimension_numbers<[1], [0], [0], [1], [0, 0, 1, 1], [], []>} : vector<8x32xbf16>, vector<32x128xbf16>, vector<8x128xf32> -> vector<8x128xf32>
    %97 = arith.addf %94, %96 : vector<8x128xf32>
    %98 = arith.negf %97 : vector<8x128xf32>
    %99 = math.exp %98 : vector<8x128xf32>
    %cst_22 = arith.constant 1.000000e+00 : f32
    %100 = vector.broadcast %cst_22 : f32 to vector<8x128xf32>
    %101 = arith.addf %100, %99 : vector<8x128xf32>
    %102 = arith.divf %100, %101 : vector<8x128xf32>
    %103 = vector.extract_strided_slice %102 {offsets = [0, 0], sizes = [8, 32], strides = [1, 1]} : vector<8x128xf32> to vector<8x32xf32>
    %104 = vector.extract_strided_slice %102 {offsets = [0, 32], sizes = [8, 32], strides = [1, 1]} : vector<8x128xf32> to vector<8x32xf32>
    %105 = vector.extract_strided_slice %102 {offsets = [0, 96], sizes = [8, 32], strides = [1, 1]} : vector<8x128xf32> to vector<8x32xf32>
    %106 = vector.extract_strided_slice %97 {offsets = [0, 64], sizes = [8, 32], strides = [1, 1]} : vector<8x128xf32> to vector<8x32xf32>
    %107 = math.tanh %106 : vector<8x32xf32>
    %108 = arith.mulf %104, %90 : vector<8x32xf32>
    %109 = arith.mulf %103, %107 : vector<8x32xf32>
    %110 = arith.addf %108, %109 : vector<8x32xf32>
    %111 = math.tanh %110 : vector<8x32xf32>
    %112 = arith.mulf %105, %111 : vector<8x32xf32>
    %113 = vector.extract_strided_slice %7 {offsets = [5, 0, 0], sizes = [1, 8, 128], strides = [1, 1, 1]} : vector<8x8x128xf32> to vector<1x8x128xf32>
    %114 = vector.shape_cast %113 : vector<1x8x128xf32> to vector<8x128xf32>
    %115 = arith.truncf %112 : vector<8x32xf32> to vector<8x32xbf16>
    %cst_23 = arith.constant dense<0.000000e+00> : vector<8x128xf32>
    %116 = tpu.matmul %115, %8, %cst_23 {dimension_numbers = #tpu.dot_dimension_numbers<[1], [0], [0], [1], [0, 0, 1, 1], [], []>} : vector<8x32xbf16>, vector<32x128xbf16>, vector<8x128xf32> -> vector<8x128xf32>
    %117 = arith.addf %114, %116 : vector<8x128xf32>
    %118 = arith.negf %117 : vector<8x128xf32>
    %119 = math.exp %118 : vector<8x128xf32>
    %cst_24 = arith.constant 1.000000e+00 : f32
    %120 = vector.broadcast %cst_24 : f32 to vector<8x128xf32>
    %121 = arith.addf %120, %119 : vector<8x128xf32>
    %122 = arith.divf %120, %121 : vector<8x128xf32>
    %123 = vector.extract_strided_slice %122 {offsets = [0, 0], sizes = [8, 32], strides = [1, 1]} : vector<8x128xf32> to vector<8x32xf32>
    %124 = vector.extract_strided_slice %122 {offsets = [0, 32], sizes = [8, 32], strides = [1, 1]} : vector<8x128xf32> to vector<8x32xf32>
    %125 = vector.extract_strided_slice %122 {offsets = [0, 96], sizes = [8, 32], strides = [1, 1]} : vector<8x128xf32> to vector<8x32xf32>
    %126 = vector.extract_strided_slice %117 {offsets = [0, 64], sizes = [8, 32], strides = [1, 1]} : vector<8x128xf32> to vector<8x32xf32>
    %127 = math.tanh %126 : vector<8x32xf32>
    %128 = arith.mulf %124, %110 : vector<8x32xf32>
    %129 = arith.mulf %123, %127 : vector<8x32xf32>
    %130 = arith.addf %128, %129 : vector<8x32xf32>
    %131 = math.tanh %130 : vector<8x32xf32>
    %132 = arith.mulf %125, %131 : vector<8x32xf32>
    %133 = vector.extract_strided_slice %7 {offsets = [6, 0, 0], sizes = [1, 8, 128], strides = [1, 1, 1]} : vector<8x8x128xf32> to vector<1x8x128xf32>
    %134 = vector.shape_cast %133 : vector<1x8x128xf32> to vector<8x128xf32>
    %135 = arith.truncf %132 : vector<8x32xf32> to vector<8x32xbf16>
    %cst_25 = arith.constant dense<0.000000e+00> : vector<8x128xf32>
    %136 = tpu.matmul %135, %8, %cst_25 {dimension_numbers = #tpu.dot_dimension_numbers<[1], [0], [0], [1], [0, 0, 1, 1], [], []>} : vector<8x32xbf16>, vector<32x128xbf16>, vector<8x128xf32> -> vector<8x128xf32>
    %137 = arith.addf %134, %136 : vector<8x128xf32>
    %138 = arith.negf %137 : vector<8x128xf32>
    %139 = math.exp %138 : vector<8x128xf32>
    %cst_26 = arith.constant 1.000000e+00 : f32
    %140 = vector.broadcast %cst_26 : f32 to vector<8x128xf32>
    %141 = arith.addf %140, %139 : vector<8x128xf32>
    %142 = arith.divf %140, %141 : vector<8x128xf32>
    %143 = vector.extract_strided_slice %142 {offsets = [0, 0], sizes = [8, 32], strides = [1, 1]} : vector<8x128xf32> to vector<8x32xf32>
    %144 = vector.extract_strided_slice %142 {offsets = [0, 32], sizes = [8, 32], strides = [1, 1]} : vector<8x128xf32> to vector<8x32xf32>
    %145 = vector.extract_strided_slice %142 {offsets = [0, 96], sizes = [8, 32], strides = [1, 1]} : vector<8x128xf32> to vector<8x32xf32>
    %146 = vector.extract_strided_slice %137 {offsets = [0, 64], sizes = [8, 32], strides = [1, 1]} : vector<8x128xf32> to vector<8x32xf32>
    %147 = math.tanh %146 : vector<8x32xf32>
    %148 = arith.mulf %144, %130 : vector<8x32xf32>
    %149 = arith.mulf %143, %147 : vector<8x32xf32>
    %150 = arith.addf %148, %149 : vector<8x32xf32>
    %151 = math.tanh %150 : vector<8x32xf32>
    %152 = arith.mulf %145, %151 : vector<8x32xf32>
    %153 = vector.extract_strided_slice %7 {offsets = [7, 0, 0], sizes = [1, 8, 128], strides = [1, 1, 1]} : vector<8x8x128xf32> to vector<1x8x128xf32>
    %154 = vector.shape_cast %153 : vector<1x8x128xf32> to vector<8x128xf32>
    %155 = arith.truncf %152 : vector<8x32xf32> to vector<8x32xbf16>
    %cst_27 = arith.constant dense<0.000000e+00> : vector<8x128xf32>
    %156 = tpu.matmul %155, %8, %cst_27 {dimension_numbers = #tpu.dot_dimension_numbers<[1], [0], [0], [1], [0, 0, 1, 1], [], []>} : vector<8x32xbf16>, vector<32x128xbf16>, vector<8x128xf32> -> vector<8x128xf32>
    %157 = arith.addf %154, %156 : vector<8x128xf32>
    %158 = arith.negf %157 : vector<8x128xf32>
    %159 = math.exp %158 : vector<8x128xf32>
    %cst_28 = arith.constant 1.000000e+00 : f32
    %160 = vector.broadcast %cst_28 : f32 to vector<8x128xf32>
    %161 = arith.addf %160, %159 : vector<8x128xf32>
    %162 = arith.divf %160, %161 : vector<8x128xf32>
    %163 = vector.extract_strided_slice %162 {offsets = [0, 0], sizes = [8, 32], strides = [1, 1]} : vector<8x128xf32> to vector<8x32xf32>
    %164 = vector.extract_strided_slice %162 {offsets = [0, 32], sizes = [8, 32], strides = [1, 1]} : vector<8x128xf32> to vector<8x32xf32>
    %165 = vector.extract_strided_slice %162 {offsets = [0, 96], sizes = [8, 32], strides = [1, 1]} : vector<8x128xf32> to vector<8x32xf32>
    %166 = vector.extract_strided_slice %157 {offsets = [0, 64], sizes = [8, 32], strides = [1, 1]} : vector<8x128xf32> to vector<8x32xf32>
    %167 = math.tanh %166 : vector<8x32xf32>
    %168 = arith.mulf %164, %150 : vector<8x32xf32>
    %169 = arith.mulf %163, %167 : vector<8x32xf32>
    %170 = arith.addf %168, %169 : vector<8x32xf32>
    %171 = math.tanh %170 : vector<8x32xf32>
    %172 = arith.mulf %165, %171 : vector<8x32xf32>
    %173 = arith.truncf %172 : vector<8x32xf32> to vector<8x32xbf16>
    %cst_29 = arith.constant dense<0.000000e+00> : vector<8x128xf32>
    %174 = tpu.matmul %173, %9, %cst_29 {dimension_numbers = #tpu.dot_dimension_numbers<[1], [0], [0], [1], [0, 0, 1, 1], [], []>} : vector<8x32xbf16>, vector<32x128xbf16>, vector<8x128xf32> -> vector<8x128xf32>
    %175 = arith.addf %10, %174 : vector<8x128xf32>
    %176 = arith.negf %175 : vector<8x128xf32>
    %177 = math.exp %176 : vector<8x128xf32>
    %cst_30 = arith.constant 1.000000e+00 : f32
    %178 = vector.broadcast %cst_30 : f32 to vector<8x128xf32>
    %179 = arith.addf %178, %177 : vector<8x128xf32>
    %180 = arith.divf %178, %179 : vector<8x128xf32>
    %181 = vector.extract_strided_slice %180 {offsets = [0, 0], sizes = [8, 32], strides = [1, 1]} : vector<8x128xf32> to vector<8x32xf32>
    %182 = vector.extract_strided_slice %180 {offsets = [0, 32], sizes = [8, 32], strides = [1, 1]} : vector<8x128xf32> to vector<8x32xf32>
    %183 = vector.extract_strided_slice %180 {offsets = [0, 96], sizes = [8, 32], strides = [1, 1]} : vector<8x128xf32> to vector<8x32xf32>
    %184 = vector.extract_strided_slice %175 {offsets = [0, 64], sizes = [8, 32], strides = [1, 1]} : vector<8x128xf32> to vector<8x32xf32>
    %185 = math.tanh %184 : vector<8x32xf32>
    %186 = arith.mulf %182, %170 : vector<8x32xf32>
    %187 = arith.mulf %181, %185 : vector<8x32xf32>
    %188 = arith.addf %186, %187 : vector<8x32xf32>
    %189 = math.tanh %188 : vector<8x32xf32>
    %190 = arith.mulf %183, %189 : vector<8x32xf32>
    %191 = arith.truncf %190 : vector<8x32xf32> to vector<8x32xbf16>
    %cst_31 = arith.constant dense<0.000000e+00> : vector<8x128xf32>
    %192 = tpu.matmul %191, %9, %cst_31 {dimension_numbers = #tpu.dot_dimension_numbers<[1], [0], [0], [1], [0, 0, 1, 1], [], []>} : vector<8x32xbf16>, vector<32x128xbf16>, vector<8x128xf32> -> vector<8x128xf32>
    %193 = arith.addf %10, %192 : vector<8x128xf32>
    %194 = arith.negf %193 : vector<8x128xf32>
    %195 = math.exp %194 : vector<8x128xf32>
    %cst_32 = arith.constant 1.000000e+00 : f32
    %196 = vector.broadcast %cst_32 : f32 to vector<8x128xf32>
    %197 = arith.addf %196, %195 : vector<8x128xf32>
    %198 = arith.divf %196, %197 : vector<8x128xf32>
    %199 = vector.extract_strided_slice %198 {offsets = [0, 0], sizes = [8, 32], strides = [1, 1]} : vector<8x128xf32> to vector<8x32xf32>
    %200 = vector.extract_strided_slice %198 {offsets = [0, 32], sizes = [8, 32], strides = [1, 1]} : vector<8x128xf32> to vector<8x32xf32>
    %201 = vector.extract_strided_slice %198 {offsets = [0, 96], sizes = [8, 32], strides = [1, 1]} : vector<8x128xf32> to vector<8x32xf32>
    %202 = vector.extract_strided_slice %193 {offsets = [0, 64], sizes = [8, 32], strides = [1, 1]} : vector<8x128xf32> to vector<8x32xf32>
    %203 = math.tanh %202 : vector<8x32xf32>
    %204 = arith.mulf %200, %188 : vector<8x32xf32>
    %205 = arith.mulf %199, %203 : vector<8x32xf32>
    %206 = arith.addf %204, %205 : vector<8x32xf32>
    %207 = math.tanh %206 : vector<8x32xf32>
    %208 = arith.mulf %201, %207 : vector<8x32xf32>
    %209 = arith.truncf %208 : vector<8x32xf32> to vector<8x32xbf16>
    %cst_33 = arith.constant dense<0.000000e+00> : vector<8x128xf32>
    %210 = tpu.matmul %209, %9, %cst_33 {dimension_numbers = #tpu.dot_dimension_numbers<[1], [0], [0], [1], [0, 0, 1, 1], [], []>} : vector<8x32xbf16>, vector<32x128xbf16>, vector<8x128xf32> -> vector<8x128xf32>
    %211 = arith.addf %10, %210 : vector<8x128xf32>
    %212 = arith.negf %211 : vector<8x128xf32>
    %213 = math.exp %212 : vector<8x128xf32>
    %cst_34 = arith.constant 1.000000e+00 : f32
    %214 = vector.broadcast %cst_34 : f32 to vector<8x128xf32>
    %215 = arith.addf %214, %213 : vector<8x128xf32>
    %216 = arith.divf %214, %215 : vector<8x128xf32>
    %217 = vector.extract_strided_slice %216 {offsets = [0, 0], sizes = [8, 32], strides = [1, 1]} : vector<8x128xf32> to vector<8x32xf32>
    %218 = vector.extract_strided_slice %216 {offsets = [0, 32], sizes = [8, 32], strides = [1, 1]} : vector<8x128xf32> to vector<8x32xf32>
    %219 = vector.extract_strided_slice %216 {offsets = [0, 96], sizes = [8, 32], strides = [1, 1]} : vector<8x128xf32> to vector<8x32xf32>
    %220 = vector.extract_strided_slice %211 {offsets = [0, 64], sizes = [8, 32], strides = [1, 1]} : vector<8x128xf32> to vector<8x32xf32>
    %221 = math.tanh %220 : vector<8x32xf32>
    %222 = arith.mulf %218, %206 : vector<8x32xf32>
    %223 = arith.mulf %217, %221 : vector<8x32xf32>
    %224 = arith.addf %222, %223 : vector<8x32xf32>
    %225 = math.tanh %224 : vector<8x32xf32>
    %226 = arith.mulf %219, %225 : vector<8x32xf32>
    %227 = tpu.concatenate %172, %190, %208, %226 in 0 : vector<8x32xf32>, vector<8x32xf32>, vector<8x32xf32>, vector<8x32xf32> -> vector<32x32xf32>
    %228 = arith.truncf %227 : vector<32x32xf32> to vector<32x32xbf16>
    %c0_35 = arith.constant 0 : index
    %c0_36 = arith.constant 0 : index
    %229 = vector.load %arg4[%c0_35, %c0_36] : memref<32x16xbf16, #tpu.memory_space<vmem>>, vector<32x16xbf16>
    %cst_37 = arith.constant dense<0.000000e+00> : vector<32x16xf32>
    %230 = tpu.matmul %228, %229, %cst_37 {dimension_numbers = #tpu.dot_dimension_numbers<[1], [0], [0], [1], [0, 0, 1, 1], [], []>} : vector<32x32xbf16>, vector<32x16xbf16>, vector<32x16xf32> -> vector<32x16xf32>
    %c0_38 = arith.constant 0 : index
    %c0_39 = arith.constant 0 : index
    %231 = vector.load %arg6[%c0_38, %c0_39] : memref<32x16xf32, #tpu.memory_space<vmem>>, vector<32x16xf32>
    tpu.vector_store %arg6[%c0_38, %c0_39], %230 {strides = array<i32>} : memref<32x16xf32, #tpu.memory_space<vmem>>, vector<32x16xf32>,
    return
  }
}

</mosaic_0001>

<llo_original>
// kernel: lstm_theta_forward.1
$region0: #{lstm_theta_forward.1}
  #allocation0 [shape = 'u32[]', space=smem, size = 0x4, offset = 0x4, fixed_abs, tag = 'smem constant byte address 0x4 - core index']
  #allocation1 [shape = 'u32[144,128]{1,0:T(1,128)}', space=vmem, size = 0x12000, scoped, tag = 'internal scratch']
  %s0 = inlined_call_operand.vmem [shape: bf16[64,16], index: 0, kind: input, shape index: {}]
  %s1 = inlined_call_operand.vmem [shape: bf16[16,128], index: 1, kind: input, shape index: {}]
  %s2 = inlined_call_operand.vmem [shape: bf16[32,128], index: 2, kind: input, shape index: {}]
  %s3 = inlined_call_operand.vmem [shape: bf16[32,128], index: 3, kind: input, shape index: {}]
  %s4 = inlined_call_operand.vmem [shape: bf16[32,16], index: 4, kind: input, shape index: {}]
  %s5 = inlined_call_operand.vmem [shape: f32[8,128], index: 5, kind: input, shape index: {}]
  %s6 = inlined_call_operand.vmem [shape: f32[32,16], index: 6, kind: output, shape index: {}]
  %s7 = sld [smem:[#allocation0]]
  $region34: #{lstm_theta_forward.1} parent=0
    _
  %s9 = ssub.s32 1, %s7
  %s10 = scalar_select 0, %s9, %s7
  // Predicated region
  $region2: #{lstm_theta_forward.1} parent=0 // pred_check
    _
  $region3: #{lstm_theta_forward.1} parent=0 // pred_check_branch
    %12 = sbr.rel (0) target = $region5
  $region4: #{lstm_theta_forward.1} parent=0 // pred_region
    _
  $region5: #{lstm_theta_forward.1} parent=0 // pred_fallthru
    _
  // Predicated region
  $region6: #{lstm_theta_forward.1} parent=0 // pred_check
    _
  $region7: #{lstm_theta_forward.1} parent=0 // pred_check_branch
    %14 = sbr.rel (0) target = $region9
  $region8: #{lstm_theta_forward.1} parent=0 // pred_region
    _
  $region9: #{lstm_theta_forward.1} parent=0 // pred_fallthru
    _
  // Predicated region
  $region10: #{lstm_theta_forward.1} parent=0 // pred_check
    _
  $region11: #{lstm_theta_forward.1} parent=0 // pred_check_branch
    %16 = sbr.rel (0) target = $region13
  $region12: #{lstm_theta_forward.1} parent=0 // pred_region
    _
  $region13: #{lstm_theta_forward.1} parent=0 // pred_fallthru
    _
  // Predicated region
  $region14: #{lstm_theta_forward.1} parent=0 // pred_check
    _
  $region15: #{lstm_theta_forward.1} parent=0 // pred_check_branch
    %18 = sbr.rel (0) target = $region17
  $region16: #{lstm_theta_forward.1} parent=0 // pred_region
    _
  $region17: #{lstm_theta_forward.1} parent=0 // pred_fallthru
    _
  // Predicated region
  $region18: #{lstm_theta_forward.1} parent=0 // pred_check
    _
  $region19: #{lstm_theta_forward.1} parent=0 // pred_check_branch
    %20 = sbr.rel (0) target = $region21
  $region20: #{lstm_theta_forward.1} parent=0 // pred_region
    _
  $region21: #{lstm_theta_forward.1} parent=0 // pred_fallthru
    _
  // Predicated region
  $region22: #{lstm_theta_forward.1} parent=0 // pred_check
    _
  $region23: #{lstm_theta_forward.1} parent=0 // pred_check_branch
    %22 = sbr.rel (0) target = $region25
  $region24: #{lstm_theta_forward.1} parent=0 // pred_region
    _
  $region25: #{lstm_theta_forward.1} parent=0 // pred_fallthru
    _
  %v24 = vld [vmem:[%s0] sm:$0xf]
  %v25 = vld [vmem:[%s0 + $0x4] sm:$0xf]
  %v26 = vld [vmem:[%s0 + $0x8] sm:$0xf]
  %v27 = vld [vmem:[%s0 + $0xc] sm:$0xf]
  %v28 = vld [vmem:[%s0 + $0x10] sm:$0xf]
  %v29 = vld [vmem:[%s0 + $0x14] sm:$0xf]
  %v30 = vld [vmem:[%s0 + $0x18] sm:$0xf]
  %v31 = vld [vmem:[%s0 + $0x1c] sm:$0xf]
  %v32 = vld [vmem:[%s1] sm:$0xf]
  %v33 = vld [vmem:[%s1 + $0x4] sm:$0xf]
  %v42 = vunpack.c.l.b16 %v24
  %v43 = vunpack.c.l.b16 %v25
  %v44 = vunpack.c.l.b16 %v26
  %v45 = vunpack.c.l.b16 %v27
  %v46 = vunpack.c.l.b16 %v28
  %v47 = vunpack.c.l.b16 %v29
  %v48 = vunpack.c.l.b16 %v30
  %v49 = vunpack.c.l.b16 %v31
  %v50 = vpack.c.b16 %v43, %v42
  %v51 = vpack.c.b16 %v45, %v44
  %v52 = vpack.c.b16 %v47, %v46
  %v53 = vpack.c.b16 %v49, %v48
  %v56 = vunpack.c.l.b16 %v32
  %v57 = vunpack.c.l.b16 %v33
  %v58 = vpack.c.b16 %v57, %v56
  %vm60 = vcmask 130048
  %v62 = vsel %vm60, %v50, 0
  %v65 = vsel %vm60, %v51, 0
  %v68 = vsel %vm60, %v52, 0
  %v71 = vsel %vm60, %v53, 0
  %73 = vmatprep.subr.bf16.mxu0 0
  %74 = vmatpush1.bf16.msra.mxu0 %v58
  %75 = vmatprep.subr.bf16.mxu0 0
  %76 = vmatpush1.bf16.msra.mxu0 0
  %77 = vmatprep.subr.bf16.mxu0 0
  %78 = vmatpush1.bf16.msra.mxu0 0
  %79 = vmatprep.subr.bf16.mxu0 0
  %80 = vmatpush1.bf16.msra.mxu0 0
  %81 = vmatprep.subr.bf16.mxu0 0
  %82 = vmatpush1.bf16.msra.mxu0 0
  %83 = vmatprep.subr.bf16.mxu0 0
  %84 = vmatpush1.bf16.msra.mxu0 0
  %85 = vmatprep.subr.bf16.mxu0 0
  %86 = vmatpush1.bf16.msra.mxu0 0
  %87 = vmatprep.subr.bf16.mxu0 0
  %88 = vmatpush1.bf16.msra.mxu0 0
  %89 = vmatprep.subr.bf16.mxu0 0
  %90 = vmatpush1.bf16.msra.mxu0 0
  %91 = vmatprep.subr.bf16.mxu0 0
  %92 = vmatpush1.bf16.msra.mxu0 0
  %93 = vmatprep.subr.bf16.mxu0 0
  %94 = vmatpush1.bf16.msra.mxu0 0
  %95 = vmatprep.subr.bf16.mxu0 0
  %96 = vmatpush1.bf16.msra.mxu0 0
  %97 = vmatprep.subr.bf16.mxu0 0
  %98 = vmatpush1.bf16.msra.mxu0 0
  %99 = vmatprep.subr.bf16.mxu0 0
  %100 = vmatpush1.bf16.msra.mxu0 0
  %101 = vmatprep.subr.bf16.mxu0 0
  %102 = vmatpush1.bf16.msra.mxu0 0
  %103 = vmatprep.subr.bf16.mxu0 0
  %104 = vmatpush1.bf16.msra.mxu0 0
  %105 = vmatprep.mubr.bf16.mxu0 0
  %106 = vmatmul.mubr.bf16.gmra.mrb[0].mxu0 %v62
  %v107 = vpop.f32.mrb[0].mxu0
  %v108 = vadd.f32 0.0, %v107
  %v109 = vpop.f32.mrb[0].mxu0
  %v110 = vpop.f32.mrb[0].mxu0
  %v111 = vadd.f32 0.0, %v110
  %v112 = vpop.f32.mrb[0].mxu0
  %113 = vmatprep.mubr.bf16.mxu0 0
  %114 = vmatmul.mubr.bf16.gmra.mrb[0].mxu0 %v65
  %v115 = vpop.f32.mrb[0].mxu0
  %v116 = vadd.f32 0.0, %v115
  %v117 = vpop.f32.mrb[0].mxu0
  %v118 = vpop.f32.mrb[0].mxu0
  %v119 = vadd.f32 0.0, %v118
  %v120 = vpop.f32.mrb[0].mxu0
  %121 = vmatprep.mubr.bf16.mxu0 0
  %122 = vmatmul.mubr.bf16.gmra.mrb[0].mxu0 %v68
  %v123 = vpop.f32.mrb[0].mxu0
  %v124 = vadd.f32 0.0, %v123
  %v125 = vpop.f32.mrb[0].mxu0
  %v126 = vpop.f32.mrb[0].mxu0
  %v127 = vadd.f32 0.0, %v126
  %v128 = vpop.f32.mrb[0].mxu0
  %129 = vmatprep.mubr.bf16.mxu0 0
  %130 = vmatmul.mubr.bf16.gmra.mrb[0].mxu0 %v71
  %v131 = vpop.f32.mrb[0].mxu0
  %v132 = vadd.f32 0.0, %v131
  %v133 = vpop.f32.mrb[0].mxu0
  %v134 = vpop.f32.mrb[0].mxu0
  %v135 = vadd.f32 0.0, %v134
  %v136 = vpop.f32.mrb[0].mxu0
  %137 = vdwg.mxu0
  %v138 = vld [vmem:[%s5] sm:$0xff]
  %v139 = vadd.f32 %v108, %v138
  %v140 = vadd.f32 %v111, %v138
  %v141 = vadd.f32 %v116, %v138
  %v142 = vadd.f32 %v119, %v138
  %v143 = vadd.f32 %v124, %v138
  %v144 = vadd.f32 %v127, %v138
  %v145 = vadd.f32 %v132, %v138
  %v146 = vadd.f32 %v135, %v138
  %v147 = vld [vmem:[%s2] sm:$0xf]
  %v148 = vld [vmem:[%s2 + $0x4] sm:$0xf]
  %v149 = vld [vmem:[%s2 + $0x8] sm:$0xf]
  %v150 = vld [vmem:[%s2 + $0xc] sm:$0xf]
  %v151 = vld [vmem:[%s3] sm:$0xf]
  %v152 = vld [vmem:[%s3 + $0x4] sm:$0xf]
  %v153 = vld [vmem:[%s3 + $0x8] sm:$0xf]
  %v154 = vld [vmem:[%s3 + $0xc] sm:$0xf]
  %v159 = vunpack.c.l.b16 %v147
  %v160 = vunpack.c.l.b16 %v148
  %v161 = vunpack.c.l.b16 %v149
  %v162 = vunpack.c.l.b16 %v150
  %v163 = vpack.c.b16 %v160, %v159
  %v164 = vpack.c.b16 %v162, %v161
  %vm167 = vcmask 261120
  %v169 = vsel %vm167, 0, 0
  %171 = vmatprep.subr.bf16.mxu0 0
  %172 = vmatpush1.bf16.msra.mxu0 %v163
  %173 = vmatprep.subr.bf16.mxu0 0
  %174 = vmatpush1.bf16.msra.mxu0 %v164
  %175 = vmatprep.subr.bf16.mxu0 0
  %176 = vmatpush1.bf16.msra.mxu0 0
  %177 = vmatprep.subr.bf16.mxu0 0
  %178 = vmatpush1.bf16.msra.mxu0 0
  %179 = vmatprep.subr.bf16.mxu0 0
  %180 = vmatpush1.bf16.msra.mxu0 0
  %181 = vmatprep.subr.bf16.mxu0 0
  %182 = vmatpush1.bf16.msra.mxu0 0
  %183 = vmatprep.subr.bf16.mxu0 0
  %184 = vmatpush1.bf16.msra.mxu0 0
  %185 = vmatprep.subr.bf16.mxu0 0
  %186 = vmatpush1.bf16.msra.mxu0 0
  %187 = vmatprep.subr.bf16.mxu0 0
  %188 = vmatpush1.bf16.msra.mxu0 0
  %189 = vmatprep.subr.bf16.mxu0 0
  %190 = vmatpush1.bf16.msra.mxu0 0
  %191 = vmatprep.subr.bf16.mxu0 0
  %192 = vmatpush1.bf16.msra.mxu0 0
  %193 = vmatprep.subr.bf16.mxu0 0
  %194 = vmatpush1.bf16.msra.mxu0 0
  %195 = vmatprep.subr.bf16.mxu0 0
  %196 = vmatpush1.bf16.msra.mxu0 0
  %197 = vmatprep.subr.bf16.mxu0 0
  %198 = vmatpush1.bf16.msra.mxu0 0
  %199 = vmatprep.subr.bf16.mxu0 0
  %200 = vmatpush1.bf16.msra.mxu0 0
  %201 = vmatprep.subr.bf16.mxu0 0
  %202 = vmatpush1.bf16.msra.mxu0 0
  %203 = vmatprep.mubr.bf16.mxu0 0
  %204 = vmatmul.mubr.bf16.gmra.mrb[0].mxu0 %v169
  %v205 = vpop.f32.mrb[0].mxu0
  %v206 = vadd.f32 0.0, %v205
  %v207 = vpop.f32.mrb[0].mxu0
  %v208 = vpop.f32.mrb[0].mxu0
  %v209 = vpop.f32.mrb[0].mxu0
  %210 = vdwg.mxu0
  %v211 = vadd.f32 %v139, %v206
  %v212 = vxor.u32 %v211, 2147483648
  %v213 = vmul.f32 %v212, 1.442695
  %v214 = vpow.pop %v213
  %v215 = vadd.f32 %v214, 1.0
  %v216 = vrcp.pop %v215
  %v217 = vmul.f32 1.0, %v216
  %v218 = vtanh.pop %v211
  %v219 = vmul.f32 %v217, 0.0
  %221 = vrot.lane.b32.xlu0 %v218, 64
  %v222 = vpop.permute.xlu0 %221
  %v224 = vmul.f32 %v217, %v222
  %226 = vrot.lane.b32.xlu0 %v224, 32
  %v227 = vpop.permute.xlu0 %226
  %v229 = vadd.f32 %v219, %v227
  %v230 = vtanh.pop %v229
  %232 = vrot.lane.b32.xlu0 %v230, 64
  %v233 = vpop.permute.xlu0 %232
  %v235 = vmul.f32 %v217, %v233
  %v236 = vpack.c.bf16 %v235, %v235
  %238 = vrot.lane.b32.xlu0 %v236, 32
  %v239 = vpop.permute.xlu0 %238
  %v241 = vsel %vm167, %v239, 0
  %243 = vmatprep.subr.bf16.mxu0 0
  %244 = vmatpush1.bf16.msra.mxu0 %v163
  %245 = vmatprep.subr.bf16.mxu0 0
  %246 = vmatpush1.bf16.msra.mxu0 %v164
  %247 = vmatprep.subr.bf16.mxu0 0
  %248 = vmatpush1.bf16.msra.mxu0 0
  %249 = vmatprep.subr.bf16.mxu0 0
  %250 = vmatpush1.bf16.msra.mxu0 0
  %251 = vmatprep.subr.bf16.mxu0 0
  %252 = vmatpush1.bf16.msra.mxu0 0
  %253 = vmatprep.subr.bf16.mxu0 0
  %254 = vmatpush1.bf16.msra.mxu0 0
  %255 = vmatprep.subr.bf16.mxu0 0
  %256 = vmatpush1.bf16.msra.mxu0 0
  %257 = vmatprep.subr.bf16.mxu0 0
  %258 = vmatpush1.bf16.msra.mxu0 0
  %259 = vmatprep.subr.bf16.mxu0 0
  %260 = vmatpush1.bf16.msra.mxu0 0
  %261 = vmatprep.subr.bf16.mxu0 0
  %262 = vmatpush1.bf16.msra.mxu0 0
  %263 = vmatprep.subr.bf16.mxu0 0
  %264 = vmatpush1.bf16.msra.mxu0 0
  %265 = vmatprep.subr.bf16.mxu0 0
  %266 = vmatpush1.bf16.msra.mxu0 0
  %267 = vmatprep.subr.bf16.mxu0 0
  %268 = vmatpush1.bf16.msra.mxu0 0
  %269 = vmatprep.subr.bf16.mxu0 0
  %270 = vmatpush1.bf16.msra.mxu0 0
  %271 = vmatprep.subr.bf16.mxu0 0
  %272 = vmatpush1.bf16.msra.mxu0 0
  %273 = vmatprep.subr.bf16.mxu0 0
  %274 = vmatpush1.bf16.msra.mxu0 0
  %275 = vmatprep.mubr.bf16.mxu0 0
  %276 = vmatmul.mubr.bf16.gmra.mrb[0].mxu0 %v241
  %v277 = vpop.f32.mrb[0].mxu0
  %v278 = vadd.f32 0.0, %v277
  %v279 = vpop.f32.mrb[0].mxu0
  %v280 = vpop.f32.mrb[0].mxu0
  %v281 = vpop.f32.mrb[0].mxu0
  %282 = vdwg.mxu0
  %v283 = vadd.f32 %v140, %v278
  %v284 = vxor.u32 %v283, 2147483648
  %v285 = vmul.f32 %v284, 1.442695
  %v286 = vpow.pop %v285
  %v287 = vadd.f32 %v286, 1.0
  %v288 = vrcp.pop %v287
  %v289 = vmul.f32 1.0, %v288
  %v290 = vtanh.pop %v283
  %v291 = vmul.f32 %v289, %v229
  %293 = vrot.lane.b32.xlu0 %v290, 64
  %v294 = vpop.permute.xlu0 %293
  %v296 = vmul.f32 %v289, %v294
  %298 = vrot.lane.b32.xlu0 %v296, 32
  %v299 = vpop.permute.xlu0 %298
  %v301 = vadd.f32 %v291, %v299
  %v302 = vtanh.pop %v301
  %304 = vrot.lane.b32.xlu0 %v302, 64
  %v305 = vpop.permute.xlu0 %304
  %v307 = vmul.f32 %v289, %v305
  %v308 = vpack.c.bf16 %v307, %v307
  %310 = vrot.lane.b32.xlu0 %v308, 32
  %v311 = vpop.permute.xlu0 %310
  %v313 = vsel %vm167, %v311, 0
  %315 = vmatprep.subr.bf16.mxu0 0
  %316 = vmatpush1.bf16.msra.mxu0 %v163
  %317 = vmatprep.subr.bf16.mxu0 0
  %318 = vmatpush1.bf16.msra.mxu0 %v164
  %319 = vmatprep.subr.bf16.mxu0 0
  %320 = vmatpush1.bf16.msra.mxu0 0
  %321 = vmatprep.subr.bf16.mxu0 0
  %322 = vmatpush1.bf16.msra.mxu0 0
  %323 = vmatprep.subr.bf16.mxu0 0
  %324 = vmatpush1.bf16.msra.mxu0 0
  %325 = vmatprep.subr.bf16.mxu0 0
  %326 = vmatpush1.bf16.msra.mxu0 0
  %327 = vmatprep.subr.bf16.mxu0 0
  %328 = vmatpush1.bf16.msra.mxu0 0
  %329 = vmatprep.subr.bf16.mxu0 0
  %330 = vmatpush1.bf16.msra.mxu0 0
  %331 = vmatprep.subr.bf16.mxu0 0
  %332 = vmatpush1.bf16.msra.mxu0 0
  %333 = vmatprep.subr.bf16.mxu0 0
  %334 = vmatpush1.bf16.msra.mxu0 0
  %335 = vmatprep.subr.bf16.mxu0 0
  %336 = vmatpush1.bf16.msra.mxu0 0
  %337 = vmatprep.subr.bf16.mxu0 0
  %338 = vmatpush1.bf16.msra.mxu0 0
  %339 = vmatprep.subr.bf16.mxu0 0
  %340 = vmatpush1.bf16.msra.mxu0 0
  %341 = vmatprep.subr.bf16.mxu0 0
  %342 = vmatpush1.bf16.msra.mxu0 0
  %343 = vmatprep.subr.bf16.mxu0 0
  %344 = vmatpush1.bf16.msra.mxu0 0
  %345 = vmatprep.subr.bf16.mxu0 0
  %346 = vmatpush1.bf16.msra.mxu0 0
  %347 = vmatprep.mubr.bf16.mxu0 0
  %348 = vmatmul.mubr.bf16.gmra.mrb[0].mxu0 %v313
  %v349 = vpop.f32.mrb[0].mxu0
  %v350 = vadd.f32 0.0, %v349
  %v351 = vpop.f32.mrb[0].mxu0
  %v352 = vpop.f32.mrb[0].mxu0
  %v353 = vpop.f32.mrb[0].mxu0
  %354 = vdwg.mxu0
  %v355 = vadd.f32 %v141, %v350
  %v356 = vxor.u32 %v355, 2147483648
  %v357 = vmul.f32 %v356, 1.442695
  %v358 = vpow.pop %v357
  %v359 = vadd.f32 %v358, 1.0
  %v360 = vrcp.pop %v359
  %v361 = vmul.f32 1.0, %v360
  %v362 = vtanh.pop %v355
  %v363 = vmul.f32 %v361, %v301
  %365 = vrot.lane.b32.xlu0 %v362, 64
  %v366 = vpop.permute.xlu0 %365
  %v368 = vmul.f32 %v361, %v366
  %370 = vrot.lane.b32.xlu0 %v368, 32
  %v371 = vpop.permute.xlu0 %370
  %v373 = vadd.f32 %v363, %v371
  %v374 = vtanh.pop %v373
  %376 = vrot.lane.b32.xlu0 %v374, 64
  %v377 = vpop.permute.xlu0 %376
  %v379 = vmul.f32 %v361, %v377
  %v380 = vpack.c.bf16 %v379, %v379
  %382 = vrot.lane.b32.xlu0 %v380, 32
  %v383 = vpop.permute.xlu0 %382
  %v385 = vsel %vm167, %v383, 0
  %387 = vmatprep.subr.bf16.mxu0 0
  %388 = vmatpush1.bf16.msra.mxu0 %v163
  %389 = vmatprep.subr.bf16.mxu0 0
  %390 = vmatpush1.bf16.msra.mxu0 %v164
  %391 = vmatprep.subr.bf16.mxu0 0
  %392 = vmatpush1.bf16.msra.mxu0 0
  %393 = vmatprep.subr.bf16.mxu0 0
  %394 = vmatpush1.bf16.msra.mxu0 0
  %395 = vmatprep.subr.bf16.mxu0 0
  %396 = vmatpush1.bf16.msra.mxu0 0
  %397 = vmatprep.subr.bf16.mxu0 0
  %398 = vmatpush1.bf16.msra.mxu0 0
  %399 = vmatprep.subr.bf16.mxu0 0
  %400 = vmatpush1.bf16.msra.mxu0 0
  %401 = vmatprep.subr.bf16.mxu0 0
  %402 = vmatpush1.bf16.msra.mxu0 0
  %403 = vmatprep.subr.bf16.mxu0 0
  %404 = vmatpush1.bf16.msra.mxu0 0
  %405 = vmatprep.subr.bf16.mxu0 0
  %406 = vmatpush1.bf16.msra.mxu0 0
  %407 = vmatprep.subr.bf16.mxu0 0
  %408 = vmatpush1.bf16.msra.mxu0 0
  %409 = vmatprep.subr.bf16.mxu0 0
  %410 = vmatpush1.bf16.msra.mxu0 0
  %411 = vmatprep.subr.bf16.mxu0 0
  %412 = vmatpush1.bf16.msra.mxu0 0
  %413 = vmatprep.subr.bf16.mxu0 0
  %414 = vmatpush1.bf16.msra.mxu0 0
  %415 = vmatprep.subr.bf16.mxu0 0
  %416 = vmatpush1.bf16.msra.mxu0 0
  %417 = vmatprep.subr.bf16.mxu0 0
  %418 = vmatpush1.bf16.msra.mxu0 0
  %419 = vmatprep.mubr.bf16.mxu0 0
  %420 = vmatmul.mubr.bf16.gmra.mrb[0].mxu0 %v385
  %v421 = vpop.f32.mrb[0].mxu0
  %v422 = vadd.f32 0.0, %v421
  %v423 = vpop.f32.mrb[0].mxu0
  %v424 = vpop.f32.mrb[0].mxu0
  %v425 = vpop.f32.mrb[0].mxu0
  %426 = vdwg.mxu0
  %v427 = vadd.f32 %v142, %v422
  %v428 = vxor.u32 %v427, 2147483648
  %v429 = vmul.f32 %v428, 1.442695
  %v430 = vpow.pop %v429
  %v431 = vadd.f32 %v430, 1.0
  %v432 = vrcp.pop %v431
  %v433 = vmul.f32 1.0, %v432
  %v434 = vtanh.pop %v427
  %v435 = vmul.f32 %v433, %v373
  %437 = vrot.lane.b32.xlu0 %v434, 64
  %v438 = vpop.permute.xlu0 %437
  %v440 = vmul.f32 %v433, %v438
  %442 = vrot.lane.b32.xlu0 %v440, 32
  %v443 = vpop.permute.xlu0 %442
  %v445 = vadd.f32 %v435, %v443
  %v446 = vtanh.pop %v445
  %448 = vrot.lane.b32.xlu0 %v446, 64
  %v449 = vpop.permute.xlu0 %448
  %v451 = vmul.f32 %v433, %v449
  %v452 = vpack.c.bf16 %v451, %v451
  %454 = vrot.lane.b32.xlu0 %v452, 32
  %v455 = vpop.permute.xlu0 %454
  %v457 = vsel %vm167, %v455, 0
  %459 = vmatprep.subr.bf16.mxu0 0
  %460 = vmatpush1.bf16.msra.mxu0 %v163
  %461 = vmatprep.subr.bf16.mxu0 0
  %462 = vmatpush1.bf16.msra.mxu0 %v164
  %463 = vmatprep.subr.bf16.mxu0 0
  %464 = vmatpush1.bf16.msra.mxu0 0
  %465 = vmatprep.subr.bf16.mxu0 0
  %466 = vmatpush1.bf16.msra.mxu0 0
  %467 = vmatprep.subr.bf16.mxu0 0
  %468 = vmatpush1.bf16.msra.mxu0 0
  %469 = vmatprep.subr.bf16.mxu0 0
  %470 = vmatpush1.bf16.msra.mxu0 0
  %471 = vmatprep.subr.bf16.mxu0 0
  %472 = vmatpush1.bf16.msra.mxu0 0
  %473 = vmatprep.subr.bf16.mxu0 0
  %474 = vmatpush1.bf16.msra.mxu0 0
  %475 = vmatprep.subr.bf16.mxu0 0
  %476 = vmatpush1.bf16.msra.mxu0 0
  %477 = vmatprep.subr.bf16.mxu0 0
  %478 = vmatpush1.bf16.msra.mxu0 0
  %479 = vmatprep.subr.bf16.mxu0 0
  %480 = vmatpush1.bf16.msra.mxu0 0
  %481 = vmatprep.subr.bf16.mxu0 0
  %482 = vmatpush1.bf16.msra.mxu0 0
  %483 = vmatprep.subr.bf16.mxu0 0
  %484 = vmatpush1.bf16.msra.mxu0 0
  %485 = vmatprep.subr.bf16.mxu0 0
  %486 = vmatpush1.bf16.msra.mxu0 0
  %487 = vmatprep.subr.bf16.mxu0 0
  %488 = vmatpush1.bf16.msra.mxu0 0
  %489 = vmatprep.subr.bf16.mxu0 0
  %490 = vmatpush1.bf16.msra.mxu0 0
  %491 = vmatprep.mubr.bf16.mxu0 0
  %492 = vmatmul.mubr.bf16.gmra.mrb[0].mxu0 %v457
  %v493 = vpop.f32.mrb[0].mxu0
  %v494 = vadd.f32 0.0, %v493
  %v495 = vpop.f32.mrb[0].mxu0
  %v496 = vpop.f32.mrb[0].mxu0
  %v497 = vpop.f32.mrb[0].mxu0
  %498 = vdwg.mxu0
  %v499 = vadd.f32 %v143, %v494
  %v500 = vxor.u32 %v499, 2147483648
  %v501 = vmul.f32 %v500, 1.442695
  %v502 = vpow.pop %v501
  %v503 = vadd.f32 %v502, 1.0
  %v504 = vrcp.pop %v503
  %v505 = vmul.f32 1.0, %v504
  %v506 = vtanh.pop %v499
  %v507 = vmul.f32 %v505, %v445
  %509 = vrot.lane.b32.xlu0 %v506, 64
  %v510 = vpop.permute.xlu0 %509
  %v512 = vmul.f32 %v505, %v510
  %514 = vrot.lane.b32.xlu0 %v512, 32
  %v515 = vpop.permute.xlu0 %514
  %v517 = vadd.f32 %v507, %v515
  %v518 = vtanh.pop %v517
  %520 = vrot.lane.b32.xlu0 %v518, 64
  %v521 = vpop.permute.xlu0 %520
  %v523 = vmul.f32 %v505, %v521
  %v524 = vpack.c.bf16 %v523, %v523
  %526 = vrot.lane.b32.xlu0 %v524, 32
  %v527 = vpop.permute.xlu0 %526
  %v529 = vsel %vm167, %v527, 0
  %531 = vmatprep.subr.bf16.mxu0 0
  %532 = vmatpush1.bf16.msra.mxu0 %v163
  %533 = vmatprep.subr.bf16.mxu0 0
  %534 = vmatpush1.bf16.msra.mxu0 %v164
  %535 = vmatprep.subr.bf16.mxu0 0
  %536 = vmatpush1.bf16.msra.mxu0 0
  %537 = vmatprep.subr.bf16.mxu0 0
  %538 = vmatpush1.bf16.msra.mxu0 0
  %539 = vmatprep.subr.bf16.mxu0 0
  %540 = vmatpush1.bf16.msra.mxu0 0
  %541 = vmatprep.subr.bf16.mxu0 0
  %542 = vmatpush1.bf16.msra.mxu0 0
  %543 = vmatprep.subr.bf16.mxu0 0
  %544 = vmatpush1.bf16.msra.mxu0 0
  %545 = vmatprep.subr.bf16.mxu0 0
  %546 = vmatpush1.bf16.msra.mxu0 0
  %547 = vmatprep.subr.bf16.mxu0 0
  %548 = vmatpush1.bf16.msra.mxu0 0
  %549 = vmatprep.subr.bf16.mxu0 0
  %550 = vmatpush1.bf16.msra.mxu0 0
  %551 = vmatprep.subr.bf16.mxu0 0
  %552 = vmatpush1.bf16.msra.mxu0 0
  %553 = vmatprep.subr.bf16.mxu0 0
  %554 = vmatpush1.bf16.msra.mxu0 0
  %555 = vmatprep.subr.bf16.mxu0 0
  %556 = vmatpush1.bf16.msra.mxu0 0
  %557 = vmatprep.subr.bf16.mxu0 0
  %558 = vmatpush1.bf16.msra.mxu0 0
  %559 = vmatprep.subr.bf16.mxu0 0
  %560 = vmatpush1.bf16.msra.mxu0 0
  %561 = vmatprep.subr.bf16.mxu0 0
  %562 = vmatpush1.bf16.msra.mxu0 0
  %563 = vmatprep.mubr.bf16.mxu0 0
  %564 = vmatmul.mubr.bf16.gmra.mrb[0].mxu0 %v529
  %v565 = vpop.f32.mrb[0].mxu0
  %v566 = vadd.f32 0.0, %v565
  %v567 = vpop.f32.mrb[0].mxu0
  %v568 = vpop.f32.mrb[0].mxu0
  %v569 = vpop.f32.mrb[0].mxu0
  %570 = vdwg.mxu0
  %v571 = vadd.f32 %v144, %v566
  %v572 = vxor.u32 %v571, 2147483648
  %v573 = vmul.f32 %v572, 1.442695
  %v574 = vpow.pop %v573
  %v575 = vadd.f32 %v574, 1.0
  %v576 = vrcp.pop %v575
  %v577 = vmul.f32 1.0, %v576
  %v578 = vtanh.pop %v571
  %v579 = vmul.f32 %v577, %v517
  %581 = vrot.lane.b32.xlu0 %v578, 64
  %v582 = vpop.permute.xlu0 %581
  %v584 = vmul.f32 %v577, %v582
  %586 = vrot.lane.b32.xlu0 %v584, 32
  %v587 = vpop.permute.xlu0 %586
  %v589 = vadd.f32 %v579, %v587
  %v590 = vtanh.pop %v589
  %592 = vrot.lane.b32.xlu0 %v590, 64
  %v593 = vpop.permute.xlu0 %592
  %v595 = vmul.f32 %v577, %v593
  %v596 = vpack.c.bf16 %v595, %v595
  %598 = vrot.lane.b32.xlu0 %v596, 32
  %v599 = vpop.permute.xlu0 %598
  %v601 = vsel %vm167, %v599, 0
  %603 = vmatprep.subr.bf16.mxu0 0
  %604 = vmatpush1.bf16.msra.mxu0 %v163
  %605 = vmatprep.subr.bf16.mxu0 0
  %606 = vmatpush1.bf16.msra.mxu0 %v164
  %607 = vmatprep.subr.bf16.mxu0 0
  %608 = vmatpush1.bf16.msra.mxu0 0
  %609 = vmatprep.subr.bf16.mxu0 0
  %610 = vmatpush1.bf16.msra.mxu0 0
  %611 = vmatprep.subr.bf16.mxu0 0
  %612 = vmatpush1.bf16.msra.mxu0 0
  %613 = vmatprep.subr.bf16.mxu0 0
  %614 = vmatpush1.bf16.msra.mxu0 0
  %615 = vmatprep.subr.bf16.mxu0 0
  %616 = vmatpush1.bf16.msra.mxu0 0
  %617 = vmatprep.subr.bf16.mxu0 0
  %618 = vmatpush1.bf16.msra.mxu0 0
  %619 = vmatprep.subr.bf16.mxu0 0
  %620 = vmatpush1.bf16.msra.mxu0 0
  %621 = vmatprep.subr.bf16.mxu0 0
  %622 = vmatpush1.bf16.msra.mxu0 0
  %623 = vmatprep.subr.bf16.mxu0 0
  %624 = vmatpush1.bf16.msra.mxu0 0
  %625 = vmatprep.subr.bf16.mxu0 0
  %626 = vmatpush1.bf16.msra.mxu0 0
  %627 = vmatprep.subr.bf16.mxu0 0
  %628 = vmatpush1.bf16.msra.mxu0 0
  %629 = vmatprep.subr.bf16.mxu0 0
  %630 = vmatpush1.bf16.msra.mxu0 0
  %631 = vmatprep.subr.bf16.mxu0 0
  %632 = vmatpush1.bf16.msra.mxu0 0
  %633 = vmatprep.subr.bf16.mxu0 0
  %634 = vmatpush1.bf16.msra.mxu0 0
  %635 = vmatprep.mubr.bf16.mxu0 0
  %636 = vmatmul.mubr.bf16.gmra.mrb[0].mxu0 %v601
  %v637 = vpop.f32.mrb[0].mxu0
  %v638 = vadd.f32 0.0, %v637
  %v639 = vpop.f32.mrb[0].mxu0
  %v640 = vpop.f32.mrb[0].mxu0
  %v641 = vpop.f32.mrb[0].mxu0
  %642 = vdwg.mxu0
  %v643 = vadd.f32 %v145, %v638
  %v644 = vxor.u32 %v643, 2147483648
  %v645 = vmul.f32 %v644, 1.442695
  %v646 = vpow.pop %v645
  %v647 = vadd.f32 %v646, 1.0
  %v648 = vrcp.pop %v647
  %v649 = vmul.f32 1.0, %v648
  %v650 = vtanh.pop %v643
  %v651 = vmul.f32 %v649, %v589
  %653 = vrot.lane.b32.xlu0 %v650, 64
  %v654 = vpop.permute.xlu0 %653
  %v656 = vmul.f32 %v649, %v654
  %658 = vrot.lane.b32.xlu0 %v656, 32
  %v659 = vpop.permute.xlu0 %658
  %v661 = vadd.f32 %v651, %v659
  %v662 = vtanh.pop %v661
  %664 = vrot.lane.b32.xlu0 %v662, 64
  %v665 = vpop.permute.xlu0 %664
  %v667 = vmul.f32 %v649, %v665
  %v668 = vpack.c.bf16 %v667, %v667
  %670 = vrot.lane.b32.xlu0 %v668, 32
  %v671 = vpop.permute.xlu0 %670
  %v673 = vsel %vm167, %v671, 0
  %675 = vmatprep.subr.bf16.mxu0 0
  %676 = vmatpush1.bf16.msra.mxu0 %v163
  %677 = vmatprep.subr.bf16.mxu0 0
  %678 = vmatpush1.bf16.msra.mxu0 %v164
  %679 = vmatprep.subr.bf16.mxu0 0
  %680 = vmatpush1.bf16.msra.mxu0 0
  %681 = vmatprep.subr.bf16.mxu0 0
  %682 = vmatpush1.bf16.msra.mxu0 0
  %683 = vmatprep.subr.bf16.mxu0 0
  %684 = vmatpush1.bf16.msra.mxu0 0
  %685 = vmatprep.subr.bf16.mxu0 0
  %686 = vmatpush1.bf16.msra.mxu0 0
  %687 = vmatprep.subr.bf16.mxu0 0
  %688 = vmatpush1.bf16.msra.mxu0 0
  %689 = vmatprep.subr.bf16.mxu0 0
  %690 = vmatpush1.bf16.msra.mxu0 0
  %691 = vmatprep.subr.bf16.mxu0 0
  %692 = vmatpush1.bf16.msra.mxu0 0
  %693 = vmatprep.subr.bf16.mxu0 0
  %694 = vmatpush1.bf16.msra.mxu0 0
  %695 = vmatprep.subr.bf16.mxu0 0
  %696 = vmatpush1.bf16.msra.mxu0 0
  %697 = vmatprep.subr.bf16.mxu0 0
  %698 = vmatpush1.bf16.msra.mxu0 0
  %699 = vmatprep.subr.bf16.mxu0 0
  %700 = vmatpush1.bf16.msra.mxu0 0
  %701 = vmatprep.subr.bf16.mxu0 0
  %702 = vmatpush1.bf16.msra.mxu0 0
  %703 = vmatprep.subr.bf16.mxu0 0
  %704 = vmatpush1.bf16.msra.mxu0 0
  %705 = vmatprep.subr.bf16.mxu0 0
  %706 = vmatpush1.bf16.msra.mxu0 0
  %707 = vmatprep.mubr.bf16.mxu0 0
  %708 = vmatmul.mubr.bf16.gmra.mrb[0].mxu0 %v673
  %v709 = vpop.f32.mrb[0].mxu0
  %v710 = vadd.f32 0.0, %v709
  %v711 = vpop.f32.mrb[0].mxu0
  %v712 = vpop.f32.mrb[0].mxu0
  %v713 = vpop.f32.mrb[0].mxu0
  %714 = vdwg.mxu0
  %v715 = vadd.f32 %v146, %v710
  %v716 = vxor.u32 %v715, 2147483648
  %v717 = vmul.f32 %v716, 1.442695
  %v718 = vpow.pop %v717
  %v719 = vadd.f32 %v718, 1.0
  %v720 = vrcp.pop %v719
  %v721 = vmul.f32 1.0, %v720
  %v722 = vtanh.pop %v715
  %v723 = vmul.f32 %v721, %v661
  %725 = vrot.lane.b32.xlu0 %v722, 64
  %v726 = vpop.permute.xlu0 %725
  %v728 = vmul.f32 %v721, %v726
  %730 = vrot.lane.b32.xlu0 %v728, 32
  %v731 = vpop.permute.xlu0 %730
  %v733 = vadd.f32 %v723, %v731
  %v734 = vtanh.pop %v733
  %736 = vrot.lane.b32.xlu0 %v734, 64
  %v737 = vpop.permute.xlu0 %736
  %v739 = vmul.f32 %v721, %v737
  %v740 = vpack.c.bf16 %v739, %v739
  %742 = vrot.lane.b32.xlu0 %v740, 32
  %v743 = vpop.permute.xlu0 %742
  %v748 = vunpack.c.l.b16 %v151
  %v749 = vunpack.c.l.b16 %v152
  %v750 = vunpack.c.l.b16 %v153
  %v751 = vunpack.c.l.b16 %v154
  %v752 = vpack.c.b16 %v749, %v748
  %v753 = vpack.c.b16 %v751, %v750
  %v757 = vsel %vm167, %v743, 0
  %759 = vmatprep.subr.bf16.mxu0 0
  %760 = vmatpush1.bf16.msra.mxu0 %v752
  %761 = vmatprep.subr.bf16.mxu0 0
  %762 = vmatpush1.bf16.msra.mxu0 %v753
  %763 = vmatprep.subr.bf16.mxu0 0
  %764 = vmatpush1.bf16.msra.mxu0 0
  %765 = vmatprep.subr.bf16.mxu0 0
  %766 = vmatpush1.bf16.msra.mxu0 0
  %767 = vmatprep.subr.bf16.mxu0 0
  %768 = vmatpush1.bf16.msra.mxu0 0
  %769 = vmatprep.subr.bf16.mxu0 0
  %770 = vmatpush1.bf16.msra.mxu0 0
  %771 = vmatprep.subr.bf16.mxu0 0
  %772 = vmatpush1.bf16.msra.mxu0 0
  %773 = vmatprep.subr.bf16.mxu0 0
  %774 = vmatpush1.bf16.msra.mxu0 0
  %775 = vmatprep.subr.bf16.mxu0 0
  %776 = vmatpush1.bf16.msra.mxu0 0
  %777 = vmatprep.subr.bf16.mxu0 0
  %778 = vmatpush1.bf16.msra.mxu0 0
  %779 = vmatprep.subr.bf16.mxu0 0
  %780 = vmatpush1.bf16.msra.mxu0 0
  %781 = vmatprep.subr.bf16.mxu0 0
  %782 = vmatpush1.bf16.msra.mxu0 0
  %783 = vmatprep.subr.bf16.mxu0 0
  %784 = vmatpush1.bf16.msra.mxu0 0
  %785 = vmatprep.subr.bf16.mxu0 0
  %786 = vmatpush1.bf16.msra.mxu0 0
  %787 = vmatprep.subr.bf16.mxu0 0
  %788 = vmatpush1.bf16.msra.mxu0 0
  %789 = vmatprep.subr.bf16.mxu0 0
  %790 = vmatpush1.bf16.msra.mxu0 0
  %791 = vmatprep.mubr.bf16.mxu0 0
  %792 = vmatmul.mubr.bf16.gmra.mrb[0].mxu0 %v757
  %v793 = vpop.f32.mrb[0].mxu0
  %v794 = vadd.f32 0.0, %v793
  %v795 = vpop.f32.mrb[0].mxu0
  %v796 = vpop.f32.mrb[0].mxu0
  %v797 = vpop.f32.mrb[0].mxu0
  %798 = vdwg.mxu0
  %v799 = vadd.f32 %v138, %v794
  %v800 = vxor.u32 %v799, 2147483648
  %v801 = vmul.f32 %v800, 1.442695
  %v802 = vpow.pop %v801
  %v803 = vadd.f32 %v802, 1.0
  %v804 = vrcp.pop %v803
  %v805 = vmul.f32 1.0, %v804
  %v806 = vtanh.pop %v799
  %v807 = vmul.f32 %v805, %v733
  %809 = vrot.lane.b32.xlu0 %v806, 64
  %v810 = vpop.permute.xlu0 %809
  %v812 = vmul.f32 %v805, %v810
  %814 = vrot.lane.b32.xlu0 %v812, 32
  %v815 = vpop.permute.xlu0 %814
  %v817 = vadd.f32 %v807, %v815
  %v818 = vtanh.pop %v817
  %820 = vrot.lane.b32.xlu0 %v818, 64
  %v821 = vpop.permute.xlu0 %820
  %v823 = vmul.f32 %v805, %v821
  %v824 = vpack.c.bf16 %v823, %v823
  %826 = vrot.lane.b32.xlu0 %v824, 32
  %v827 = vpop.permute.xlu0 %826
  %v829 = vsel %vm167, %v827, 0
  %831 = vmatprep.subr.bf16.mxu0 0
  %832 = vmatpush1.bf16.msra.mxu0 %v752
  %833 = vmatprep.subr.bf16.mxu0 0
  %834 = vmatpush1.bf16.msra.mxu0 %v753
  %835 = vmatprep.subr.bf16.mxu0 0
  %836 = vmatpush1.bf16.msra.mxu0 0
  %837 = vmatprep.subr.bf16.mxu0 0
  %838 = vmatpush1.bf16.msra.mxu0 0
  %839 = vmatprep.subr.bf16.mxu0 0
  %840 = vmatpush1.bf16.msra.mxu0 0
  %841 = vmatprep.subr.bf16.mxu0 0
  %842 = vmatpush1.bf16.msra.mxu0 0
  %843 = vmatprep.subr.bf16.mxu0 0
  %844 = vmatpush1.bf16.msra.mxu0 0
  %845 = vmatprep.subr.bf16.mxu0 0
  %846 = vmatpush1.bf16.msra.mxu0 0
  %847 = vmatprep.subr.bf16.mxu0 0
  %848 = vmatpush1.bf16.msra.mxu0 0
  %849 = vmatprep.subr.bf16.mxu0 0
  %850 = vmatpush1.bf16.msra.mxu0 0
  %851 = vmatprep.subr.bf16.mxu0 0
  %852 = vmatpush1.bf16.msra.mxu0 0
  %853 = vmatprep.subr.bf16.mxu0 0
  %854 = vmatpush1.bf16.msra.mxu0 0
  %855 = vmatprep.subr.bf16.mxu0 0
  %856 = vmatpush1.bf16.msra.mxu0 0
  %857 = vmatprep.subr.bf16.mxu0 0
  %858 = vmatpush1.bf16.msra.mxu0 0
  %859 = vmatprep.subr.bf16.mxu0 0
  %860 = vmatpush1.bf16.msra.mxu0 0
  %861 = vmatprep.subr.bf16.mxu0 0
  %862 = vmatpush1.bf16.msra.mxu0 0
  %863 = vmatprep.mubr.bf16.mxu0 0
  %864 = vmatmul.mubr.bf16.gmra.mrb[0].mxu0 %v829
  %v865 = vpop.f32.mrb[0].mxu0
  %v866 = vadd.f32 0.0, %v865
  %v867 = vpop.f32.mrb[0].mxu0
  %v868 = vpop.f32.mrb[0].mxu0
  %v869 = vpop.f32.mrb[0].mxu0
  %870 = vdwg.mxu0
  %v871 = vadd.f32 %v138, %v866
  %v872 = vxor.u32 %v871, 2147483648
  %v873 = vmul.f32 %v872, 1.442695
  %v874 = vpow.pop %v873
  %v875 = vadd.f32 %v874, 1.0
  %v876 = vrcp.pop %v875
  %v877 = vmul.f32 1.0, %v876
  %v878 = vtanh.pop %v871
  %v879 = vmul.f32 %v877, %v817
  %881 = vrot.lane.b32.xlu0 %v878, 64
  %v882 = vpop.permute.xlu0 %881
  %v884 = vmul.f32 %v877, %v882
  %886 = vrot.lane.b32.xlu0 %v884, 32
  %v887 = vpop.permute.xlu0 %886
  %v889 = vadd.f32 %v879, %v887
  %v890 = vtanh.pop %v889
  %892 = vrot.lane.b32.xlu0 %v890, 64
  %v893 = vpop.permute.xlu0 %892
  %v895 = vmul.f32 %v877, %v893
  %v896 = vpack.c.bf16 %v895, %v895
  %898 = vrot.lane.b32.xlu0 %v896, 32
  %v899 = vpop.permute.xlu0 %898
  %v901 = vsel %vm167, %v899, 0
  %903 = vmatprep.subr.bf16.mxu0 0
  %904 = vmatpush1.bf16.msra.mxu0 %v752
  %905 = vmatprep.subr.bf16.mxu0 0
  %906 = vmatpush1.bf16.msra.mxu0 %v753
  %907 = vmatprep.subr.bf16.mxu0 0
  %908 = vmatpush1.bf16.msra.mxu0 0
  %909 = vmatprep.subr.bf16.mxu0 0
  %910 = vmatpush1.bf16.msra.mxu0 0
  %911 = vmatprep.subr.bf16.mxu0 0
  %912 = vmatpush1.bf16.msra.mxu0 0
  %913 = vmatprep.subr.bf16.mxu0 0
  %914 = vmatpush1.bf16.msra.mxu0 0
  %915 = vmatprep.subr.bf16.mxu0 0
  %916 = vmatpush1.bf16.msra.mxu0 0
  %917 = vmatprep.subr.bf16.mxu0 0
  %918 = vmatpush1.bf16.msra.mxu0 0
  %919 = vmatprep.subr.bf16.mxu0 0
  %920 = vmatpush1.bf16.msra.mxu0 0
  %921 = vmatprep.subr.bf16.mxu0 0
  %922 = vmatpush1.bf16.msra.mxu0 0
  %923 = vmatprep.subr.bf16.mxu0 0
  %924 = vmatpush1.bf16.msra.mxu0 0
  %925 = vmatprep.subr.bf16.mxu0 0
  %926 = vmatpush1.bf16.msra.mxu0 0
  %927 = vmatprep.subr.bf16.mxu0 0
  %928 = vmatpush1.bf16.msra.mxu0 0
  %929 = vmatprep.subr.bf16.mxu0 0
  %930 = vmatpush1.bf16.msra.mxu0 0
  %931 = vmatprep.subr.bf16.mxu0 0
  %932 = vmatpush1.bf16.msra.mxu0 0
  %933 = vmatprep.subr.bf16.mxu0 0
  %934 = vmatpush1.bf16.msra.mxu0 0
  %935 = vmatprep.mubr.bf16.mxu0 0
  %936 = vmatmul.mubr.bf16.gmra.mrb[0].mxu0 %v901
  %v937 = vpop.f32.mrb[0].mxu0
  %v938 = vadd.f32 0.0, %v937
  %v939 = vpop.f32.mrb[0].mxu0
  %v940 = vpop.f32.mrb[0].mxu0
  %v941 = vpop.f32.mrb[0].mxu0
  %942 = vdwg.mxu0
  %v943 = vadd.f32 %v138, %v938
  %v944 = vxor.u32 %v943, 2147483648
  %v945 = vmul.f32 %v944, 1.442695
  %v946 = vpow.pop %v945
  %v947 = vadd.f32 %v946, 1.0
  %v948 = vrcp.pop %v947
  %v949 = vmul.f32 1.0, %v948
  %v950 = vtanh.pop %v943
  %v951 = vmul.f32 %v949, %v889
  %953 = vrot.lane.b32.xlu0 %v950, 64
  %v954 = vpop.permute.xlu0 %953
  %v956 = vmul.f32 %v949, %v954
  %958 = vrot.lane.b32.xlu0 %v956, 32
  %v959 = vpop.permute.xlu0 %958
  %v961 = vadd.f32 %v951, %v959
  %v962 = vtanh.pop %v961
  %964 = vrot.lane.b32.xlu0 %v962, 64
  %v965 = vpop.permute.xlu0 %964
  %v967 = vmul.f32 %v949, %v965
  %v968 = vpack.c.bf16 %v823, %v739
  %v969 = vpack.c.bf16 %v967, %v895
  %v970 = vld [vmem:[%s4] sm:$0xf]
  %v971 = vld [vmem:[%s4 + $0x4] sm:$0xf]
  %v972 = vld [vmem:[%s4 + $0x8] sm:$0xf]
  %v973 = vld [vmem:[%s4 + $0xc] sm:$0xf]
  %976 = vrot.lane.b32.xlu0 %v968, 32
  %v977 = vpop.permute.xlu0 %976
  %978 = vrot.lane.b32.xlu0 %v969, 32
  %v979 = vpop.permute.xlu0 %978
  %v984 = vunpack.c.l.b16 %v970
  %v985 = vunpack.c.l.b16 %v971
  %v986 = vunpack.c.l.b16 %v972
  %v987 = vunpack.c.l.b16 %v973
  %v988 = vpack.c.b16 %v985, %v984
  %v989 = vpack.c.b16 %v987, %v986
  %v993 = vsel %vm167, %v977, 0
  %v996 = vsel %vm167, %v979, 0
  %998 = vmatprep.subr.bf16.mxu0 0
  %999 = vmatpush1.bf16.msra.mxu0 %v988
  %1000 = vmatprep.subr.bf16.mxu0 0
  %1001 = vmatpush1.bf16.msra.mxu0 %v989
  %1002 = vmatprep.subr.bf16.mxu0 0
  %1003 = vmatpush1.bf16.msra.mxu0 0
  %1004 = vmatprep.subr.bf16.mxu0 0
  %1005 = vmatpush1.bf16.msra.mxu0 0
  %1006 = vmatprep.subr.bf16.mxu0 0
  %1007 = vmatpush1.bf16.msra.mxu0 0
  %1008 = vmatprep.subr.bf16.mxu0 0
  %1009 = vmatpush1.bf16.msra.mxu0 0
  %1010 = vmatprep.subr.bf16.mxu0 0
  %1011 = vmatpush1.bf16.msra.mxu0 0
  %1012 = vmatprep.subr.bf16.mxu0 0
  %1013 = vmatpush1.bf16.msra.mxu0 0
  %1014 = vmatprep.subr.bf16.mxu0 0
  %1015 = vmatpush1.bf16.msra.mxu0 0
  %1016 = vmatprep.subr.bf16.mxu0 0
  %1017 = vmatpush1.bf16.msra.mxu0 0
  %1018 = vmatprep.subr.bf16.mxu0 0
  %1019 = vmatpush1.bf16.msra.mxu0 0
  %1020 = vmatprep.subr.bf16.mxu0 0
  %1021 = vmatpush1.bf16.msra.mxu0 0
  %1022 = vmatprep.subr.bf16.mxu0 0
  %1023 = vmatpush1.bf16.msra.mxu0 0
  %1024 = vmatprep.subr.bf16.mxu0 0
  %1025 = vmatpush1.bf16.msra.mxu0 0
  %1026 = vmatprep.subr.bf16.mxu0 0
  %1027 = vmatpush1.bf16.msra.mxu0 0
  %1028 = vmatprep.subr.bf16.mxu0 0
  %1029 = vmatpush1.bf16.msra.mxu0 0
  %1030 = vmatprep.mubr.bf16.mxu0 0
  %1031 = vmatmul.mubr.bf16.gmra.mrb[0].mxu0 %v993
  %v1032 = vpop.f32.mrb[0].mxu0
  %v1033 = vadd.f32 0.0, %v1032
  %v1034 = vpop.f32.mrb[0].mxu0
  %v1035 = vpop.f32.mrb[0].mxu0
  %v1036 = vadd.f32 0.0, %v1035
  %v1037 = vpop.f32.mrb[0].mxu0
  %1038 = vmatprep.mubr.bf16.mxu0 0
  %1039 = vmatmul.mubr.bf16.gmra.mrb[0].mxu0 %v996
  %v1040 = vpop.f32.mrb[0].mxu0
  %v1041 = vadd.f32 0.0, %v1040
  %v1042 = vpop.f32.mrb[0].mxu0
  %v1043 = vpop.f32.mrb[0].mxu0
  %v1044 = vadd.f32 0.0, %v1043
  %v1045 = vpop.f32.mrb[0].mxu0
  %1046 = vdwg.mxu0
  %1047 = vst.msk [vmem:[%s6] sm:$0xff] %vm60, %v1033
  %1048 = vst.msk [vmem:[%s6 + $0x8] sm:$0xff] %vm60, %v1036
  %1049 = vst.msk [vmem:[%s6 + $0x10] sm:$0xff] %vm60, %v1041
  %1050 = vst.msk [vmem:[%s6 + $0x18] sm:$0xff] %vm60, %v1044
  // Predicated region
  $region26: #{lstm_theta_forward.1} parent=0 // pred_check
    _
  $region27: #{lstm_theta_forward.1} parent=0 // pred_check_branch
    %1052 = sbr.rel (0) target = $region29
  $region28: #{lstm_theta_forward.1} parent=0 // pred_region
    _
  $region29: #{lstm_theta_forward.1} parent=0 // pred_fallthru
    _
  // Predicated region
  $region30: #{lstm_theta_forward.1} parent=0 // pred_check
    _
  $region31: #{lstm_theta_forward.1} parent=0 // pred_check_branch
    %1054 = sbr.rel (0) target = $region33
  $region32: #{lstm_theta_forward.1} parent=0 // pred_region
    _
  $region33: #{lstm_theta_forward.1} parent=0 // pred_fallthru
    _

</llo_original>
